<compile_context>
chip_gen: v5e
topology: v5e:2x2
jax: 0.10.0
libtpu: 0.0.40
codegen_flags: <defaults>
</compile_context>

<pallas_src>
import functools

import jax
import jax.numpy as jnp
from jax.experimental import pallas as pl
from jax.experimental.pallas import tpu as pltpu

# ----- synthetic module constants (scaled down) -----------------------------
LLAMA_DIM     = 256    # stands in for LLAMA3_EMBEDDING_DIM = 4096
CANINE_DIM    = 128    # stands in for CANINE_EMBED_DIM = 768
EMBED_DIM     = 128    # nn.Linear output dim (embed_dim ctor arg)
VOCAB         = 512    # llama token vocab (synthetic)
CHAR_VOCAB    = 256    # unicode codepoint table (synthetic)
MAX_CHARS     = 8      # max chars a token decodes to (synthetic)
CANINE_REDUCE = "sum"


def _round_up(x, m):
    return ((x + m - 1) // m) * m


def _counts_dtype():
    # bf16 VALU exists on v6e/v7x (packed vregs -> 2x elementwise throughput on the binding
    # slot); v5e and older have no bf16 VPU, so keep the histogram accumulation in f32 there.
    try:
        kind = jax.devices()[0].device_kind.lower()
    except Exception:
        kind = ""
    if any(v in kind for v in ("v2", "v3", "v4", "v5")):
        return jnp.float32
    return jnp.bfloat16


def _vmem_limit_bytes(tile_n):
    # Per-generation VMEM budget instead of a hardcoded 32 MiB (v7x only has 64 MiB physical).
    resident = (CHAR_VOCAB * EMBED_DIM * 2        # fused canine table (bf16)
                + LLAMA_DIM * EMBED_DIM * 2       # W_l (bf16)
                + EMBED_DIM * 4)                  # bias (f32)
    per_tile = (tile_n * LLAMA_DIM * 2            # h_llama bf16
                + tile_n * MAX_CHARS * 4          # char ids int32
                + tile_n * EMBED_DIM * 4)         # output f32
    intermediates = (tile_n * CHAR_VOCAB * 4      # counts (f32 worst case) + compare temps
                     + tile_n * EMBED_DIM * 4)    # f32 accumulator
    need = resident + 2 * per_tile + 2 * intermediates + (4 << 20)
    try:
        cap = pltpu.get_tpu_info().vmem_capacity_bytes
    except Exception:
        cap = 64 << 20                            # conservative (v7x-sized) fallback
    return int(min(max(need, 32 << 20), cap - (8 << 20)))


# ----- Pallas kernel: in-kernel char histogram + fused (pre-folded) projection ---------
def decoder_kernel(h_llama_ref, char_ids_ref, table_wc_ref, w_l_ref, b_ref, o_ref,
                   *, counts_dtype):
    t, n_chars = char_ids_ref.shape
    v = table_wc_ref.shape[0]

    # Char-id histogram, built as a statically-unrolled per-char compare-and-accumulate:
    #   counts[n, v] = #chars of token n with id v.
    # No (T, C, V) intermediate is materialized and there is no cross-sublane reduction.
    # Pad chars (id == -1) never match the iota, so masking is implicit.
    ids = char_ids_ref[...]                                             # (T, C) int32
    vocab_iota = jax.lax.broadcasted_iota(jnp.int32, (t, v), 1)         # (T, V) int32
    counts = jnp.zeros((t, v), counts_dtype)
    for ci in range(n_chars):                                           # static C=8, unrolled
        counts = counts + (ids[:, ci:ci + 1] == vocab_iota).astype(counts_dtype)

    # out = concat([h_llama, h_can]) @ W + b
    #     = h_llama @ W_l + counts @ (canine_table @ W_c) + b
    # (canine table folded into the projection offline; CANINE_REDUCE == 'sum').
    out = jnp.dot(h_llama_ref[...], w_l_ref[...],
                  preferred_element_type=jnp.float32)                   # (T, E) f32
    out = out + jnp.dot(counts.astype(jnp.bfloat16), table_wc_ref[...],
                        preferred_element_type=jnp.float32)
    out = out + b_ref[...]                                              # (1, E) broadcast
    o_ref[...] = out.astype(o_ref.dtype)


def _fused_proj(h_llama, char_ids, table_wc, w_l, b2d, tile_n=512):
    N = h_llama.shape[0]
    # Tile rounded to a multiple of 32 (bf16 packs (16,128) per vreg; 8-row tiles force
    # half-empty sublane packing and relayouts).  Large default tile amortizes the
    # ~0.35us per-grid-step overhead.
    tile_n = max(32, min(_round_up(tile_n, 32), _round_up(N, 32)))
    n_pad = _round_up(N, tile_n)
    if n_pad != N:
        h_llama = jnp.pad(h_llama, ((0, n_pad - N), (0, 0)))
        char_ids = jnp.pad(char_ids, ((0, n_pad - N), (0, 0)), constant_values=-1)

    grid = (n_pad // tile_n,)

    flops = 2 * n_pad * (LLAMA_DIM * EMBED_DIM + CHAR_VOCAB * EMBED_DIM)
    bytes_accessed = (n_pad * LLAMA_DIM * 2              # h_llama bf16 (streamed)
                      + n_pad * MAX_CHARS * 4            # char_ids int32 (streamed)
                      + CHAR_VOCAB * EMBED_DIM * 2       # resident fused table bf16
                      + LLAMA_DIM * EMBED_DIM * 2        # resident W_l bf16
                      + EMBED_DIM * 4                    # bias
                      + n_pad * EMBED_DIM * 4)           # output f32

    kernel = functools.partial(decoder_kernel, counts_dtype=_counts_dtype())

    grid_spec = pltpu.PrefetchScalarGridSpec(
        num_scalar_prefetch=0,
        grid=grid,
        in_specs=[
            pl.BlockSpec((tile_n, LLAMA_DIM), lambda i: (i, 0)),        # streamed
            pl.BlockSpec((tile_n, MAX_CHARS), lambda i: (i, 0)),        # streamed
            pl.BlockSpec((CHAR_VOCAB, EMBED_DIM), lambda i: (0, 0)),    # resident
            pl.BlockSpec((LLAMA_DIM, EMBED_DIM), lambda i: (0, 0)),     # resident
            pl.BlockSpec((1, EMBED_DIM), lambda i: (0, 0)),             # resident
        ],
        out_specs=pl.BlockSpec((tile_n, EMBED_DIM), lambda i: (i, 0)),
    )

    out = pl.pallas_call(
        kernel,
        out_shape=jax.ShapeDtypeStruct((n_pad, EMBED_DIM), jnp.float32),
        grid_spec=grid_spec,
        compiler_params=pltpu.CompilerParams(
            dimension_semantics=("parallel",),          # token tiles are independent
            vmem_limit_bytes=_vmem_limit_bytes(tile_n),
        ),
        cost_estimate=pl.CostEstimate(
            flops=flops, transcendentals=0, bytes_accessed=bytes_accessed),
    )(h_llama, char_ids, table_wc, w_l, b2d)

    if n_pad != N:
        out = out[:N]
    return out


# ----- glue: deterministic stand-in for tokenizer.decode -> [ord(c)] ---------
def synth_char_ids(tok_flat):
    # token_id == -1  -> empty text (char_len = 0), else 1..MAX_CHARS chars.
    # TODO(synk): real path calls tokenizer.decode + CanineEmbeddings hash-bucket
    #             embeddings; string decoding has no Pallas/JAX equivalent.
    valid = tok_flat >= 0
    char_lens = jnp.where(valid, (tok_flat % MAX_CHARS) + 1, 0)                 # (N,)
    j = jnp.arange(MAX_CHARS)[None, :]
    char_ids = (tok_flat[:, None] * 31 + j * 7) % CHAR_VOCAB                    # (N, C)
    char_ids = jnp.where(j < char_lens[:, None], char_ids, -1)                  # pad = -1
    return char_lens, char_ids


def init_params(key):
    k1, k2, k3, k4 = jax.random.split(key, 4)
    feature_dim = LLAMA_DIM + CANINE_DIM
    tok_emb = (jax.random.normal(k1, (VOCAB, LLAMA_DIM), jnp.float32) * 0.02
               ).astype(jnp.bfloat16)                                           # llama bf16
    canine_emb = jax.random.normal(k2, (CHAR_VOCAB, CANINE_DIM), jnp.float32) * 0.02
    # nn.Linear(feature_dim, EMBED_DIM): y = x @ W.T + b ; store W.T directly.
    w = jax.random.normal(k3, (feature_dim, EMBED_DIM), jnp.float32) * (
        1.0 / jnp.sqrt(feature_dim))
    b = jax.random.normal(k4, (EMBED_DIM,), jnp.float32) * 0.01
    return dict(tok_emb=tok_emb, canine_emb=canine_emb, w=w, b=b)


def llama_decoder_forward(src, params, tile_n=512):
    bs, sq = src.shape
    tok = src.reshape(-1)                                                       # (N,)
    # 1) Llama token-embedding lookup; stays bf16 into the kernel (MXU-native),
    #    accumulation in the kernel is f32 which matches `h.to(float32)` + f32 proj.
    # TODO(synk): at real dims (128K x 4096 table) this jnp.take pays an HBM round-trip
    #             (gather write + kernel re-read); move the gather in-kernel via a
    #             scalar-prefetched per-row DMA on a pl.ANY table for that regime.
    h_llama = jnp.take(params["tok_emb"], tok, axis=0)                          # (N, Dl) bf16
    # 2) synthetic char ids only — the (N, C, D_canine) embedding stream never exists;
    #    the kernel builds a char histogram and hits the pre-folded table below.
    _, char_ids = synth_char_ids(tok)                                           # (N, C)
    # 3+4) fold the CANINE table into the projection offline:
    #      counts @ (table @ W_c) == (masked char-embed sum) @ W_c exactly
    #      (counts are small integers), removing one MXU pass per tile.
    w_l = params["w"][:LLAMA_DIM].astype(jnp.bfloat16)
    table_wc = (params["canine_emb"] @ params["w"][LLAMA_DIM:]).astype(jnp.bfloat16)
    b2d = params["b"][None, :]
    out = _fused_proj(h_llama, char_ids, table_wc, w_l, b2d, tile_n=tile_n)     # (N, E) f32
    return out.reshape(bs, sq, EMBED_DIM)


def reference_forward(src, params):
    bs, sq = src.shape
    tok = src.reshape(-1)
    h_llama = jnp.take(params["tok_emb"], tok, axis=0).astype(jnp.float32)
    char_lens, char_ids = synth_char_ids(tok)
    h_char = jnp.take(params["canine_emb"], jnp.where(char_ids < 0, 0, char_ids), axis=0)
    mask = (jnp.arange(MAX_CHARS)[None, :] < char_lens[:, None]).astype(jnp.float32)
    h_can = jnp.sum(h_char * mask[:, :, None], axis=1)
    h = jnp.concatenate([h_llama, h_can], axis=-1)
    out = h @ params["w"] + params["b"]
    return out.reshape(bs, sq, EMBED_DIM)


if __name__ == "__main__":
    key = jax.random.PRNGKey(0)
    kp, ks = jax.random.split(key)
    params = init_params(kp)

    bs, sq = 2, 32
    src = jax.random.randint(ks, (bs, sq), 0, VOCAB, dtype=jnp.int32)           # (2, 32)

    # tile_n=32 keeps bf16-friendly (multiple-of-32) tiles while still exercising a
    # multi-step, even-length pipelined grid (grid=(2,)) on the small test shape.
    out = llama_decoder_forward(src, params, tile_n=32)
    out = jax.block_until_ready(out)

    ref = reference_forward(src, params)
    assert out.shape == (bs, sq, EMBED_DIM)
    assert jnp.allclose(out, ref, rtol=2e-2, atol=2e-2)

    print("KERNEL_OK")
</pallas_src>

<mosaic_0001>
module attributes {stable_mosaic.version = 11 : i64} {
  func.func @decoder_kernel(%arg0: i32, %arg1: memref<32x256xbf16, #tpu.memory_space<vmem>>, %arg2: memref<32x8xi32, #tpu.memory_space<vmem>>, %arg3: memref<256x128xbf16, #tpu.memory_space<vmem>>, %arg4: memref<256x128xbf16, #tpu.memory_space<vmem>>, %arg5: memref<1x128xf32, #tpu.memory_space<vmem>>, %arg6: memref<32x128xf32, #tpu.memory_space<vmem>>) attributes {dimension_semantics = [#tpu.dimension_semantics<parallel>], iteration_bounds = array<i64: 2>, scalar_prefetch = 0 : i64, scratch_operands = 0 : i64, tpu.core_type = #tpu.core_type<tc>, window_params = [{transform_indices = @transform_0, window_bounds = array<i64: 32, 256>}, {transform_indices = @transform_1, window_bounds = array<i64: 32, 8>}, {pipeline_mode = #tpu.pipeline_mode<synchronous>, transform_indices = @transform_2, window_bounds = array<i64: 256, 128>}, {pipeline_mode = #tpu.pipeline_mode<synchronous>, transform_indices = @transform_3, window_bounds = array<i64: 256, 128>}, {pipeline_mode = #tpu.pipeline_mode<synchronous>, transform_indices = @transform_4, window_bounds = array<i64: 1, 128>}, {transform_indices = @transform_5, window_bounds = array<i64: 32, 128>}]} {
    %c0 = arith.constant 0 : index
    %c0_0 = arith.constant 0 : index
    %0 = vector.load %arg2[%c0, %c0_0] : memref<32x8xi32, #tpu.memory_space<vmem>>, vector<32x8xi32>
    %1 = tpu.iota {dimensions = array<i32: 1>} : vector<32x256xi32>
    %cst = arith.constant 0.000000e+00 : bf16
    %2 = vector.broadcast %cst : bf16 to vector<32x256xbf16>
    %3 = vector.extract_strided_slice %0 {offsets = [0, 0], sizes = [32, 1], strides = [1, 1]} : vector<32x8xi32> to vector<32x1xi32>
    %4 = vector.broadcast %3 : vector<32x1xi32> to vector<32x256xi32>
    %5 = arith.cmpi eq, %4, %1 : vector<32x256xi32>
    %6 = arith.extui %5 : vector<32x256xi1> to vector<32x256xi32>
    %7 = arith.sitofp %6 : vector<32x256xi32> to vector<32x256xf32>
    %8 = arith.truncf %7 : vector<32x256xf32> to vector<32x256xbf16>
    %9 = arith.addf %2, %8 : vector<32x256xbf16>
    %10 = vector.extract_strided_slice %0 {offsets = [0, 1], sizes = [32, 1], strides = [1, 1]} : vector<32x8xi32> to vector<32x1xi32>
    %11 = vector.broadcast %10 : vector<32x1xi32> to vector<32x256xi32>
    %12 = arith.cmpi eq, %11, %1 : vector<32x256xi32>
    %13 = arith.extui %12 : vector<32x256xi1> to vector<32x256xi32>
    %14 = arith.sitofp %13 : vector<32x256xi32> to vector<32x256xf32>
    %15 = arith.truncf %14 : vector<32x256xf32> to vector<32x256xbf16>
    %16 = arith.addf %9, %15 : vector<32x256xbf16>
    %17 = vector.extract_strided_slice %0 {offsets = [0, 2], sizes = [32, 1], strides = [1, 1]} : vector<32x8xi32> to vector<32x1xi32>
    %18 = vector.broadcast %17 : vector<32x1xi32> to vector<32x256xi32>
    %19 = arith.cmpi eq, %18, %1 : vector<32x256xi32>
    %20 = arith.extui %19 : vector<32x256xi1> to vector<32x256xi32>
    %21 = arith.sitofp %20 : vector<32x256xi32> to vector<32x256xf32>
    %22 = arith.truncf %21 : vector<32x256xf32> to vector<32x256xbf16>
    %23 = arith.addf %16, %22 : vector<32x256xbf16>
    %24 = vector.extract_strided_slice %0 {offsets = [0, 3], sizes = [32, 1], strides = [1, 1]} : vector<32x8xi32> to vector<32x1xi32>
    %25 = vector.broadcast %24 : vector<32x1xi32> to vector<32x256xi32>
    %26 = arith.cmpi eq, %25, %1 : vector<32x256xi32>
    %27 = arith.extui %26 : vector<32x256xi1> to vector<32x256xi32>
    %28 = arith.sitofp %27 : vector<32x256xi32> to vector<32x256xf32>
    %29 = arith.truncf %28 : vector<32x256xf32> to vector<32x256xbf16>
    %30 = arith.addf %23, %29 : vector<32x256xbf16>
    %31 = vector.extract_strided_slice %0 {offsets = [0, 4], sizes = [32, 1], strides = [1, 1]} : vector<32x8xi32> to vector<32x1xi32>
    %32 = vector.broadcast %31 : vector<32x1xi32> to vector<32x256xi32>
    %33 = arith.cmpi eq, %32, %1 : vector<32x256xi32>
    %34 = arith.extui %33 : vector<32x256xi1> to vector<32x256xi32>
    %35 = arith.sitofp %34 : vector<32x256xi32> to vector<32x256xf32>
    %36 = arith.truncf %35 : vector<32x256xf32> to vector<32x256xbf16>
    %37 = arith.addf %30, %36 : vector<32x256xbf16>
    %38 = vector.extract_strided_slice %0 {offsets = [0, 5], sizes = [32, 1], strides = [1, 1]} : vector<32x8xi32> to vector<32x1xi32>
    %39 = vector.broadcast %38 : vector<32x1xi32> to vector<32x256xi32>
    %40 = arith.cmpi eq, %39, %1 : vector<32x256xi32>
    %41 = arith.extui %40 : vector<32x256xi1> to vector<32x256xi32>
    %42 = arith.sitofp %41 : vector<32x256xi32> to vector<32x256xf32>
    %43 = arith.truncf %42 : vector<32x256xf32> to vector<32x256xbf16>
    %44 = arith.addf %37, %43 : vector<32x256xbf16>
    %45 = vector.extract_strided_slice %0 {offsets = [0, 6], sizes = [32, 1], strides = [1, 1]} : vector<32x8xi32> to vector<32x1xi32>
    %46 = vector.broadcast %45 : vector<32x1xi32> to vector<32x256xi32>
    %47 = arith.cmpi eq, %46, %1 : vector<32x256xi32>
    %48 = arith.extui %47 : vector<32x256xi1> to vector<32x256xi32>
    %49 = arith.sitofp %48 : vector<32x256xi32> to vector<32x256xf32>
    %50 = arith.truncf %49 : vector<32x256xf32> to vector<32x256xbf16>
    %51 = arith.addf %44, %50 : vector<32x256xbf16>
    %52 = vector.extract_strided_slice %0 {offsets = [0, 7], sizes = [32, 1], strides = [1, 1]} : vector<32x8xi32> to vector<32x1xi32>
    %53 = vector.broadcast %52 : vector<32x1xi32> to vector<32x256xi32>
    %54 = arith.cmpi eq, %53, %1 : vector<32x256xi32>
    %55 = arith.extui %54 : vector<32x256xi1> to vector<32x256xi32>
    %56 = arith.sitofp %55 : vector<32x256xi32> to vector<32x256xf32>
    %57 = arith.truncf %56 : vector<32x256xf32> to vector<32x256xbf16>
    %58 = arith.addf %51, %57 : vector<32x256xbf16>
    %c0_1 = arith.constant 0 : index
    %c0_2 = arith.constant 0 : index
    %59 = vector.load %arg1[%c0_1, %c0_2] : memref<32x256xbf16, #tpu.memory_space<vmem>>, vector<32x256xbf16>
    %c0_3 = arith.constant 0 : index
    %c0_4 = arith.constant 0 : index
    %60 = vector.load %arg4[%c0_3, %c0_4] : memref<256x128xbf16, #tpu.memory_space<vmem>>, vector<256x128xbf16>
    %cst_5 = arith.constant dense<0.000000e+00> : vector<32x128xf32>
    %61 = tpu.matmul %59, %60, %cst_5 {dimension_numbers = #tpu.dot_dimension_numbers<[1], [0], [0], [1], [0, 0, 1, 1], [], []>} : vector<32x256xbf16>, vector<256x128xbf16>, vector<32x128xf32> -> vector<32x128xf32>
    %c0_6 = arith.constant 0 : index
    %c0_7 = arith.constant 0 : index
    %62 = vector.load %arg3[%c0_6, %c0_7] : memref<256x128xbf16, #tpu.memory_space<vmem>>, vector<256x128xbf16>
    %cst_8 = arith.constant dense<0.000000e+00> : vector<32x128xf32>
    %63 = tpu.matmul %58, %62, %cst_8 {dimension_numbers = #tpu.dot_dimension_numbers<[1], [0], [0], [1], [0, 0, 1, 1], [], []>} : vector<32x256xbf16>, vector<256x128xbf16>, vector<32x128xf32> -> vector<32x128xf32>
    %64 = arith.addf %61, %63 : vector<32x128xf32>
    %c0_9 = arith.constant 0 : index
    %c0_10 = arith.constant 0 : index
    %65 = vector.load %arg5[%c0_9, %c0_10] : memref<1x128xf32, #tpu.memory_space<vmem>>, vector<1x128xf32>
    %66 = vector.broadcast %65 : vector<1x128xf32> to vector<32x128xf32>
    %67 = arith.addf %64, %66 : vector<32x128xf32>
    %c0_11 = arith.constant 0 : index
    %c0_12 = arith.constant 0 : index
    %68 = vector.load %arg6[%c0_11, %c0_12] : memref<32x128xf32, #tpu.memory_space<vmem>>, vector<32x128xf32>
    tpu.vector_store %arg6[%c0_11, %c0_12], %67 {strides = array<i32>} : memref<32x128xf32, #tpu.memory_space<vmem>>, vector<32x128xf32>,
    return
  }
  func.func @transform_0(%arg0: i32) -> (i32, i32) {
    %c0_i32 = arith.constant 0 : i32
    %c0_i32_0 = arith.constant 0 : i32
    return %arg0, %c0_i32 : i32, i32
  }
  func.func @transform_1(%arg0: i32) -> (i32, i32) {
    %c0_i32 = arith.constant 0 : i32
    %c0_i32_0 = arith.constant 0 : i32
    return %arg0, %c0_i32 : i32, i32
  }
  func.func @transform_2(%arg0: i32) -> (i32, i32) {
    %c0_i32 = arith.constant 0 : i32
    %c0_i32_0 = arith.constant 0 : i32
    %c0_i32_1 = arith.constant 0 : i32
    return %c0_i32, %c0_i32_0 : i32, i32
  }
  func.func @transform_3(%arg0: i32) -> (i32, i32) {
    %c0_i32 = arith.constant 0 : i32
    %c0_i32_0 = arith.constant 0 : i32
    %c0_i32_1 = arith.constant 0 : i32
    return %c0_i32, %c0_i32_0 : i32, i32
  }
  func.func @transform_4(%arg0: i32) -> (i32, i32) {
    %c0_i32 = arith.constant 0 : i32
    %c0_i32_0 = arith.constant 0 : i32
    %c0_i32_1 = arith.constant 0 : i32
    return %c0_i32, %c0_i32_0 : i32, i32
  }
  func.func @transform_5(%arg0: i32) -> (i32, i32) {
    %c0_i32 = arith.constant 0 : i32
    %c0_i32_0 = arith.constant 0 : i32
    return %arg0, %c0_i32 : i32, i32
  }
}

</mosaic_0001>

<llo_original>
// kernel: tpu_custom_call.1
$region0: #{tpu_custom_call.1}
  #allocation0 [shape = 'u32[]', space=smem, size = 0x4, offset = 0x4, fixed_abs, tag = 'smem constant byte address 0x4 - core index']
  #allocation1 [shape = 'u32[72,128]{1,0:T(1,128)}', space=vmem, size = 0x9000, scoped, tag = 'internal scratch']
  %s0 = inlined_call_operand.vmem [shape: bf16[64,256], index: 0, kind: input, shape index: {}]
  %s1 = inlined_call_operand.vmem [shape: s32[64,8], index: 1, kind: input, shape index: {}]
  %s2 = inlined_call_operand.hbm [shape: bf16[256,128], index: 2, kind: input, shape index: {}]
  %s3 = inlined_call_operand.hbm [shape: bf16[256,128], index: 3, kind: input, shape index: {}]
  %s4 = inlined_call_operand.vmem [shape: f32[1,128], index: 4, kind: input, shape index: {}]
  %s5 = inlined_call_operand.hbm [shape: f32[64,128], index: 5, kind: output, shape index: {}]
  %s6 = sld [smem:[#allocation0]]
  $region61: #{tpu_custom_call.1} parent=0
    _
  %s8 = ssub.s32 1, %s6
  %s9 = scalar_select 0, %s8, %s6
  $region1: #{tpu_custom_call.1} parent=0
    #allocation2 [shape = 'u8[65536]{0}', space=vmem, size = 0x10000, scoped, tag = 'input window, operand 2, single buffered']
    #allocation3 [shape = 's32[2]{0}', space=sflag, size = 0x8, scoped, tag = 'scoped memory for tpu_custom_call.1']
    #allocation4 [shape = 's32[2]{0}', space=sflag, size = 0x8, scoped, tag = 'scoped memory for tpu_custom_call.1']
    #allocation5 [shape = 'u8[65536]{0}', space=vmem, size = 0x10000, scoped, tag = 'input window, operand 3, single buffered']
    #allocation6 [shape = 's32[1]{0}', space=sflag, size = 0x4, scoped, tag = 'scoped memory for tpu_custom_call.1']
    #allocation7 [shape = 'u8[32768]{0}', space=vmem, size = 0x8000, scoped, tag = 'output window, operand 0']
    %10 = vsyncpa [#allocation3], 0
    %11 = vsyncpa [#allocation6], 0
    %12 = vsyncpa [#allocation4], 0
    %s13 = scalar_lea.sflag [#allocation4], 1
    %14 = vsyncpa %s13, 0
    loop: start=0, step=1, limit=4
    $region2: #{tpu_custom_call.1} parent=1 // loop_pre_header
      _
    $region3: #{tpu_custom_call.1} parent=1 // loop_header
      %s16 = sphi 0, %s20
      %p17 = scmp.ge.s32.totalorder %s16, 4
      %s26 = sphi 0, %s28
      %s29 = sphi 0, %s26
      %s30 = sphi 0, %s29
      %s46 = sphi 0, %s30
      %s52 = sphi 0, %s54
      %s55 = sphi 0, %s52
      %s56 = sphi 0, %s55
      %s72 = sphi 0, %s56
      %s76 = sphi 0, %s76
      %s78 = sphi 0, %s76
      %s79 = sphi 0, %s78
      %s93 = sphi 0, %s79
      %s97 = sphi 0, %s97
      %s99 = sphi 0, %s97
      %s100 = sphi 0, %s99
      %s114 = sphi 0, %s100
      %s118 = sphi 0, %s118
      %s120 = sphi 0, %s118
      %s121 = sphi 0, %s120
      %s135 = sphi 0, %s121
      %s141 = sphi 0, %s143
      %s144 = sphi 0, %s141
      %s145 = sphi 0, %s144
      %s161 = sphi 0, %s145
    $region4: #{tpu_custom_call.1} parent=1 // loop_header_branch
      %19 = sbr.rel (%p17) target = $region8
    $region5: #{tpu_custom_call.1} parent=1 // loop_body
      %s21 = ssub.s32 %s16, 1
      %s22 = ssub.s32 %s16, 2
      %s23 = sadd.s32 %s16, 1
      %s24 = ssub.s32 %s16, %s23
      %p25 = scmp.eq.s32.totalorder %s24, 0
      %s27 = sadd.s32 %s26, 1
      %s28 = scalar_select %p25, %s26, %s27
      %p31 = pneg %p25
      %p32 = scmp.eq.s32.totalorder %s16, 1
      %p33 = por %p31, %p32
      %p34 = scmp.ne.s32.totalorder %s26, %s29
      %p35 = scmp.eq.s32.totalorder %s16, 0
      %p36 = por %p34, %p35
      %p37 = scmp.ne.s32.totalorder %s26, %s29
      %p38 = scmp.eq.s32.totalorder %s21, 1
      %p39 = por %p37, %p38
      %p40 = scmp.ne.s32.totalorder %s29, %s30
      %p41 = scmp.eq.s32.totalorder %s21, 0
      %p42 = por %p40, %p41
      %p43 = scmp.ne.s32.totalorder %s29, %s30
      %p44 = scmp.eq.s32.totalorder %s22, 1
      %p45 = por %p43, %p44
      %p47 = scmp.ne.s32.totalorder %s30, %s46
      %p48 = scmp.eq.s32.totalorder %s22, 0
      %p49 = por %p47, %p48
      %s50 = ssub.s32 %s16, %s23
      %p51 = scmp.eq.s32.totalorder %s50, 0
      %s53 = sadd.s32 %s52, 1
      %s54 = scalar_select %p51, %s52, %s53
      %p57 = pneg %p51
      %p58 = scmp.eq.s32.totalorder %s16, 1
      %p59 = por %p57, %p58
      %p60 = scmp.ne.s32.totalorder %s52, %s55
      %p61 = scmp.eq.s32.totalorder %s16, 0
      %p62 = por %p60, %p61
      %p63 = scmp.ne.s32.totalorder %s52, %s55
      %p64 = scmp.eq.s32.totalorder %s21, 1
      %p65 = por %p63, %p64
      %p66 = scmp.ne.s32.totalorder %s55, %s56
      %p67 = scmp.eq.s32.totalorder %s21, 0
      %p68 = por %p66, %p67
      %p69 = scmp.ne.s32.totalorder %s55, %s56
      %p70 = scmp.eq.s32.totalorder %s22, 1
      %p71 = por %p69, %p70
      %p73 = scmp.ne.s32.totalorder %s56, %s72
      %p74 = scmp.eq.s32.totalorder %s22, 0
      %p75 = por %p73, %p74
      %s77 = sadd.s32 %s76, 1
      %p80 = scmp.eq.s32.totalorder %s16, 1
      %p81 = scmp.ne.s32.totalorder %s76, %s78
      %p82 = scmp.eq.s32.totalorder %s16, 0
      %p83 = por %p81, %p82
      %p84 = scmp.ne.s32.totalorder %s76, %s78
      %p85 = scmp.eq.s32.totalorder %s21, 1
      %p86 = por %p84, %p85
      %p87 = scmp.ne.s32.totalorder %s78, %s79
      %p88 = scmp.eq.s32.totalorder %s21, 0
      %p89 = por %p87, %p88
      %p90 = scmp.ne.s32.totalorder %s78, %s79
      %p91 = scmp.eq.s32.totalorder %s22, 1
      %p92 = por %p90, %p91
      %p94 = scmp.ne.s32.totalorder %s79, %s93
      %p95 = scmp.eq.s32.totalorder %s22, 0
      %p96 = por %p94, %p95
      %s98 = sadd.s32 %s97, 1
      %p101 = scmp.eq.s32.totalorder %s16, 1
      %p102 = scmp.ne.s32.totalorder %s97, %s99
      %p103 = scmp.eq.s32.totalorder %s16, 0
      %p104 = por %p102, %p103
      %p105 = scmp.ne.s32.totalorder %s97, %s99
      %p106 = scmp.eq.s32.totalorder %s21, 1
      %p107 = por %p105, %p106
      %p108 = scmp.ne.s32.totalorder %s99, %s100
      %p109 = scmp.eq.s32.totalorder %s21, 0
      %p110 = por %p108, %p109
      %p111 = scmp.ne.s32.totalorder %s99, %s100
      %p112 = scmp.eq.s32.totalorder %s22, 1
      %p113 = por %p111, %p112
      %p115 = scmp.ne.s32.totalorder %s100, %s114
      %p116 = scmp.eq.s32.totalorder %s22, 0
      %p117 = por %p115, %p116
      %s119 = sadd.s32 %s118, 1
      %p122 = scmp.eq.s32.totalorder %s16, 1
      %p123 = scmp.ne.s32.totalorder %s118, %s120
      %p124 = scmp.eq.s32.totalorder %s16, 0
      %p125 = por %p123, %p124
      %p126 = scmp.ne.s32.totalorder %s118, %s120
      %p127 = scmp.eq.s32.totalorder %s21, 1
      %p128 = por %p126, %p127
      %p129 = scmp.ne.s32.totalorder %s120, %s121
      %p130 = scmp.eq.s32.totalorder %s21, 0
      %p131 = por %p129, %p130
      %p132 = scmp.ne.s32.totalorder %s120, %s121
      %p133 = scmp.eq.s32.totalorder %s22, 1
      %p134 = por %p132, %p133
      %p136 = scmp.ne.s32.totalorder %s121, %s135
      %p137 = scmp.eq.s32.totalorder %s22, 0
      %p138 = por %p136, %p137
      %s139 = ssub.s32 %s16, %s23
      %p140 = scmp.eq.s32.totalorder %s139, 0
      %s142 = sadd.s32 %s141, 1
      %s143 = scalar_select %p140, %s141, %s142
      %p146 = pneg %p140
      %p147 = scmp.eq.s32.totalorder %s16, 1
      %p148 = por %p146, %p147
      %p149 = scmp.ne.s32.totalorder %s141, %s144
      %p150 = scmp.eq.s32.totalorder %s16, 0
      %p151 = por %p149, %p150
      %p152 = scmp.ne.s32.totalorder %s141, %s144
      %p153 = scmp.eq.s32.totalorder %s21, 1
      %p154 = por %p152, %p153
      %p155 = scmp.ne.s32.totalorder %s144, %s145
      %p156 = scmp.eq.s32.totalorder %s21, 0
      %p157 = por %p155, %p156
      %p158 = scmp.ne.s32.totalorder %s144, %s145
      %p159 = scmp.eq.s32.totalorder %s22, 1
      %p160 = por %p158, %p159
      %p162 = scmp.ne.s32.totalorder %s145, %s161
      %p163 = scmp.eq.s32.totalorder %s22, 0
      %p164 = por %p162, %p163
      %p165 = scmp.le.s32.totalorder 1, %s16
      %p166 = scmp.lt.s32.totalorder %s16, 3
      %p167 = pnand %p165, %p166
      %p168 = pneg %p167
      // Predicated region
      $region9: #{tpu_custom_call.1} parent=5 // pred_check
        _
      $region10: #{tpu_custom_call.1} parent=5 // pred_check_branch
        %170 = sbr.rel (%p167) target = $region12
      $region11: #{tpu_custom_call.1} parent=5 // pred_region
        %s171 = ssub.s32 %s16, 1
        // Predicated region
        $region13: #{tpu_custom_call.1} parent=11 // pred_check
          %p172 = pneg %p89
        $region14: #{tpu_custom_call.1} parent=11 // pred_check_branch
          %174 = sbr.rel (%p172) target = $region16
        $region15: #{tpu_custom_call.1} parent=11 // pred_region
          %176 = vsyncadd [#allocation3], 0
          %s177 = sshll.u32 %s2, 4
          %s178 = int_to_ptr.hbm [resolvable:$true] %s177
          %s179 = sshll.u32 [#allocation2], 4
          %s180 = int_to_ptr.vmem [resolvable:$true] %s179
          %185 = dma.hbm_to_vmem [thread:$0]  %s178, 2048, %s180, [#allocation3], 64, 64, 4
        $region16: #{tpu_custom_call.1} parent=11 // pred_fallthru
          _
        // Predicated region
        $region17: #{tpu_custom_call.1} parent=11 // pred_check
          %p186 = pneg %p110
        $region18: #{tpu_custom_call.1} parent=11 // pred_check_branch
          %188 = sbr.rel (%p186) target = $region20
        $region19: #{tpu_custom_call.1} parent=11 // pred_region
          %190 = vsyncadd [#allocation6], 0
          %s191 = sshll.u32 %s3, 4
          %s192 = int_to_ptr.hbm [resolvable:$true] %s191
          %s193 = sshll.u32 [#allocation5], 4
          %s194 = int_to_ptr.vmem [resolvable:$true] %s193
          %199 = dma.hbm_to_vmem [thread:$0]  %s192, 2048, %s194, [#allocation6], 64, 64, 4
        $region20: #{tpu_custom_call.1} parent=11 // pred_fallthru
          _
        // Predicated region
        $region21: #{tpu_custom_call.1} parent=11 // pred_check
          %p200 = pneg %p131
        $region22: #{tpu_custom_call.1} parent=11 // pred_check_branch
          %202 = sbr.rel (%p200) target = $region24
        $region23: #{tpu_custom_call.1} parent=11 // pred_region
          _
        $region24: #{tpu_custom_call.1} parent=11 // pred_fallthru
          _
      $region12: #{tpu_custom_call.1} parent=5 // pred_fallthru
        _
      %p203 = scmp.lt.s32.totalorder %s16, 2
      // Predicated region
      $region25: #{tpu_custom_call.1} parent=5 // pred_check
        %p204 = pneg %p203
      $region26: #{tpu_custom_call.1} parent=5 // pred_check_branch
        %206 = sbr.rel (%p204) target = $region28
      $region27: #{tpu_custom_call.1} parent=5 // pred_region
        // Predicated region
        $region29: #{tpu_custom_call.1} parent=27 // pred_check
          %p207 = pneg %p36
        $region30: #{tpu_custom_call.1} parent=27 // pred_check_branch
          %209 = sbr.rel (%p207) target = $region32
        $region31: #{tpu_custom_call.1} parent=27 // pred_region
          %s210 = smul.u32 4, %s16
          %p211 = scmp.lt.s32.totalorder %s210, 7
          %s212 = scalar_select %p211, %s210, 7
          %s213 = smul.addr %s212, 2
          %s214 = smul.addr %s213, 4
          %s215 = scalar_lea.vmem %s0, %s214
          %s216 = smul.u32 4, %s16
        $region32: #{tpu_custom_call.1} parent=27 // pred_fallthru
          _
        // Predicated region
        $region33: #{tpu_custom_call.1} parent=27 // pred_check
          %p217 = pneg %p62
        $region34: #{tpu_custom_call.1} parent=27 // pred_check_branch
          %219 = sbr.rel (%p217) target = $region36
        $region35: #{tpu_custom_call.1} parent=27 // pred_region
          %s220 = smul.u32 4, %s16
          %p221 = scmp.lt.s32.totalorder %s220, 7
          %s222 = scalar_select %p221, %s220, 7
          %s223 = smul.addr %s222, 8
          %s224 = scalar_lea.vmem %s1, %s223
          %s225 = smul.u32 4, %s16
        $region36: #{tpu_custom_call.1} parent=27 // pred_fallthru
          _
      $region28: #{tpu_custom_call.1} parent=5 // pred_fallthru
        _
      %p226 = scmp.le.s32.totalorder 1, %s16
      %p227 = scmp.lt.s32.totalorder %s16, 3
      %p228 = pnand %p226, %p227
      %p229 = pneg %p228
      // Predicated region
      $region37: #{tpu_custom_call.1} parent=5 // pred_check
        _
      $region38: #{tpu_custom_call.1} parent=5 // pred_check_branch
        %231 = sbr.rel (%p228) target = $region40
      $region39: #{tpu_custom_call.1} parent=5 // pred_region
        %s232 = ssub.s32 %s16, 1
        // Predicated region
        $region41: #{tpu_custom_call.1} parent=39 // pred_check
          %p233 = pneg %p89
        $region42: #{tpu_custom_call.1} parent=39 // pred_check_branch
          %235 = sbr.rel (%p233) target = $region44
        $region43: #{tpu_custom_call.1} parent=39 // pred_region
          %237 = dma.done [#allocation3], 2048
        $region44: #{tpu_custom_call.1} parent=39 // pred_fallthru
          _
        // Predicated region
        $region45: #{tpu_custom_call.1} parent=39 // pred_check
          %p238 = pneg %p110
        $region46: #{tpu_custom_call.1} parent=39 // pred_check_branch
          %240 = sbr.rel (%p238) target = $region48
        $region47: #{tpu_custom_call.1} parent=39 // pred_region
          %242 = dma.done [#allocation6], 2048
        $region48: #{tpu_custom_call.1} parent=39 // pred_fallthru
          _
        %s243 = smul.u32 4, %s21
        %p244 = scmp.lt.s32.totalorder %s243, 7
        %s245 = scalar_select %p244, %s243, 7
        %s246 = smul.addr %s245, 2
        %s247 = smul.addr %s246, 4
        %s248 = scalar_lea.vmem %s0, %s247
        %p249 = pneg %p42
        %p250 = pneg %p39
        %s251 = smul.u32 4, %s21
        %p252 = scmp.lt.s32.totalorder %s251, 7
        %s253 = scalar_select %p252, %s251, 7
        %s254 = smul.addr %s253, 8
        %s255 = scalar_lea.vmem %s1, %s254
        %p256 = pneg %p68
        %p257 = pneg %p65
        %p258 = pneg %p89
        %p259 = pneg %p86
        %p260 = pneg %p110
        %p261 = pneg %p107
        %p262 = pneg %p131
        %p263 = pneg %p128
        %p264 = pneg %p157
        %p265 = pneg %p154
        %s266 = sand.u32 %s144, 1
        %s267 = scalar_lea.sflag [#allocation4], %s266
        %s268 = sand.u32 %s144, 1
        %s269 = smul.addr %s268, 32
        %s270 = scalar_lea.vmem [#allocation7], %s269
        %s271 = smul.u32 4, %s21
        %p272 = scmp.lt.s32.totalorder %s271, 7
        %s273 = scalar_select %p272, %s271, 7
        %s274 = smul.addr %s273, 2
        %s275 = smul.addr %s274, 4
        %s276 = scalar_lea.vmem %s0, %s275
        %s277 = smul.u32 4, %s21
        %s278 = smul.u32 4, %s21
        %p279 = scmp.lt.s32.totalorder %s278, 7
        %s280 = scalar_select %p279, %s278, 7
        %s281 = smul.addr %s280, 8
        %s282 = scalar_lea.vmem %s1, %s281
        %s283 = smul.u32 4, %s21
        %s284 = smul.u32 4, %s21
        %v285 = vld [vmem:[%s282] sm:$0xff]
        %v286 = vld [vmem:[%s282 + $0x8] sm:$0xff]
        %v287 = vld [vmem:[%s282 + $0x10] sm:$0xff]
        %v288 = vld [vmem:[%s282 + $0x18] sm:$0xff]
        %v289 = vlaneseq
        %v290 = vand.u32 %v289, 127
        %v291 = vadd.s32 %v290, 128
        %292 = vset.pattern.permute.xlu0 0
        %293 = vperm.xlu0 %292, %v285
        %v294 = vpop.permute.xlu0 %293
        %295 = vset.pattern.permute.xlu0 0
        %296 = vperm.xlu0 %295, %v286
        %v297 = vpop.permute.xlu0 %296
        %298 = vset.pattern.permute.xlu0 0
        %299 = vperm.xlu0 %298, %v287
        %v300 = vpop.permute.xlu0 %299
        %301 = vset.pattern.permute.xlu0 0
        %302 = vperm.xlu0 %301, %v288
        %v303 = vpop.permute.xlu0 %302
        %vm304 = vcmp.eq.s32.totalorder %v294, %v290
        %vm305 = vcmp.eq.s32.totalorder %v294, %v291
        %vm306 = vcmp.eq.s32.totalorder %v297, %v290
        %vm307 = vcmp.eq.s32.totalorder %v297, %v291
        %vm308 = vcmp.eq.s32.totalorder %v300, %v290
        %vm309 = vcmp.eq.s32.totalorder %v300, %v291
        %vm310 = vcmp.eq.s32.totalorder %v303, %v290
        %vm311 = vcmp.eq.s32.totalorder %v303, %v291
        %v312 = vsel %vm304, 1, 0
        %v313 = vsel %vm305, 1, 0
        %v314 = vsel %vm306, 1, 0
        %v315 = vsel %vm307, 1, 0
        %v316 = vsel %vm308, 1, 0
        %v317 = vsel %vm309, 1, 0
        %v318 = vsel %vm310, 1, 0
        %v319 = vsel %vm311, 1, 0
        %v320 = vcvt.s32.f32 %v312
        %v321 = vcvt.s32.f32 %v313
        %v322 = vcvt.s32.f32 %v314
        %v323 = vcvt.s32.f32 %v315
        %v324 = vcvt.s32.f32 %v316
        %v325 = vcvt.s32.f32 %v317
        %v326 = vcvt.s32.f32 %v318
        %v327 = vcvt.s32.f32 %v319
        %v328 = vpack.c.bf16 %v321, %v320
        %v329 = vpack.c.bf16 %v323, %v322
        %v330 = vpack.c.bf16 %v325, %v324
        %v331 = vpack.c.bf16 %v327, %v326
        %v332 = vunpack.c.l.bf16 %v328
        %v333 = vunpack.c.h.bf16 %v328
        %v334 = vunpack.c.l.bf16 %v329
        %v335 = vunpack.c.h.bf16 %v329
        %v336 = vunpack.c.l.bf16 %v330
        %v337 = vunpack.c.h.bf16 %v330
        %v338 = vunpack.c.l.bf16 %v331
        %v339 = vunpack.c.h.bf16 %v331
        %v340 = vadd.f32 %v332, 0.0
        %v341 = vadd.f32 %v333, 0.0
        %v342 = vadd.f32 %v334, 0.0
        %v343 = vadd.f32 %v335, 0.0
        %v344 = vadd.f32 %v336, 0.0
        %v345 = vadd.f32 %v337, 0.0
        %v346 = vadd.f32 %v338, 0.0
        %v347 = vadd.f32 %v339, 0.0
        %v348 = vpack.c.bf16 %v341, %v340
        %v349 = vpack.c.bf16 %v343, %v342
        %v350 = vpack.c.bf16 %v345, %v344
        %v351 = vpack.c.bf16 %v347, %v346
        %352 = vset.pattern.permute.xlu0 1
        %353 = vperm.xlu0 %352, %v285
        %v354 = vpop.permute.xlu0 %353
        %355 = vset.pattern.permute.xlu0 1
        %356 = vperm.xlu0 %355, %v286
        %v357 = vpop.permute.xlu0 %356
        %358 = vset.pattern.permute.xlu0 1
        %359 = vperm.xlu0 %358, %v287
        %v360 = vpop.permute.xlu0 %359
        %361 = vset.pattern.permute.xlu0 1
        %362 = vperm.xlu0 %361, %v288
        %v363 = vpop.permute.xlu0 %362
        %vm364 = vcmp.eq.s32.totalorder %v354, %v290
        %vm365 = vcmp.eq.s32.totalorder %v354, %v291
        %vm366 = vcmp.eq.s32.totalorder %v357, %v290
        %vm367 = vcmp.eq.s32.totalorder %v357, %v291
        %vm368 = vcmp.eq.s32.totalorder %v360, %v290
        %vm369 = vcmp.eq.s32.totalorder %v360, %v291
        %vm370 = vcmp.eq.s32.totalorder %v363, %v290
        %vm371 = vcmp.eq.s32.totalorder %v363, %v291
        %v372 = vsel %vm364, 1, 0
        %v373 = vsel %vm365, 1, 0
        %v374 = vsel %vm366, 1, 0
        %v375 = vsel %vm367, 1, 0
        %v376 = vsel %vm368, 1, 0
        %v377 = vsel %vm369, 1, 0
        %v378 = vsel %vm370, 1, 0
        %v379 = vsel %vm371, 1, 0
        %v380 = vcvt.s32.f32 %v372
        %v381 = vcvt.s32.f32 %v373
        %v382 = vcvt.s32.f32 %v374
        %v383 = vcvt.s32.f32 %v375
        %v384 = vcvt.s32.f32 %v376
        %v385 = vcvt.s32.f32 %v377
        %v386 = vcvt.s32.f32 %v378
        %v387 = vcvt.s32.f32 %v379
        %v388 = vpack.c.bf16 %v381, %v380
        %v389 = vpack.c.bf16 %v383, %v382
        %v390 = vpack.c.bf16 %v385, %v384
        %v391 = vpack.c.bf16 %v387, %v386
        %v392 = vunpack.c.l.bf16 %v348
        %v393 = vunpack.c.h.bf16 %v348
        %v394 = vunpack.c.l.bf16 %v349
        %v395 = vunpack.c.h.bf16 %v349
        %v396 = vunpack.c.l.bf16 %v350
        %v397 = vunpack.c.h.bf16 %v350
        %v398 = vunpack.c.l.bf16 %v351
        %v399 = vunpack.c.h.bf16 %v351
        %v400 = vunpack.c.l.bf16 %v388
        %v401 = vunpack.c.h.bf16 %v388
        %v402 = vunpack.c.l.bf16 %v389
        %v403 = vunpack.c.h.bf16 %v389
        %v404 = vunpack.c.l.bf16 %v390
        %v405 = vunpack.c.h.bf16 %v390
        %v406 = vunpack.c.l.bf16 %v391
        %v407 = vunpack.c.h.bf16 %v391
        %v408 = vadd.f32 %v392, %v400
        %v409 = vadd.f32 %v393, %v401
        %v410 = vadd.f32 %v394, %v402
        %v411 = vadd.f32 %v395, %v403
        %v412 = vadd.f32 %v396, %v404
        %v413 = vadd.f32 %v397, %v405
        %v414 = vadd.f32 %v398, %v406
        %v415 = vadd.f32 %v399, %v407
        %v416 = vpack.c.bf16 %v409, %v408
        %v417 = vpack.c.bf16 %v411, %v410
        %v418 = vpack.c.bf16 %v413, %v412
        %v419 = vpack.c.bf16 %v415, %v414
        %420 = vset.pattern.permute.xlu0 2
        %421 = vperm.xlu0 %420, %v285
        %v422 = vpop.permute.xlu0 %421
        %423 = vset.pattern.permute.xlu0 2
        %424 = vperm.xlu0 %423, %v286
        %v425 = vpop.permute.xlu0 %424
        %426 = vset.pattern.permute.xlu0 2
        %427 = vperm.xlu0 %426, %v287
        %v428 = vpop.permute.xlu0 %427
        %429 = vset.pattern.permute.xlu0 2
        %430 = vperm.xlu0 %429, %v288
        %v431 = vpop.permute.xlu0 %430
        %vm432 = vcmp.eq.s32.totalorder %v422, %v290
        %vm433 = vcmp.eq.s32.totalorder %v422, %v291
        %vm434 = vcmp.eq.s32.totalorder %v425, %v290
        %vm435 = vcmp.eq.s32.totalorder %v425, %v291
        %vm436 = vcmp.eq.s32.totalorder %v428, %v290
        %vm437 = vcmp.eq.s32.totalorder %v428, %v291
        %vm438 = vcmp.eq.s32.totalorder %v431, %v290
        %vm439 = vcmp.eq.s32.totalorder %v431, %v291
        %v440 = vsel %vm432, 1, 0
        %v441 = vsel %vm433, 1, 0
        %v442 = vsel %vm434, 1, 0
        %v443 = vsel %vm435, 1, 0
        %v444 = vsel %vm436, 1, 0
        %v445 = vsel %vm437, 1, 0
        %v446 = vsel %vm438, 1, 0
        %v447 = vsel %vm439, 1, 0
        %v448 = vcvt.s32.f32 %v440
        %v449 = vcvt.s32.f32 %v441
        %v450 = vcvt.s32.f32 %v442
        %v451 = vcvt.s32.f32 %v443
        %v452 = vcvt.s32.f32 %v444
        %v453 = vcvt.s32.f32 %v445
        %v454 = vcvt.s32.f32 %v446
        %v455 = vcvt.s32.f32 %v447
        %v456 = vpack.c.bf16 %v449, %v448
        %v457 = vpack.c.bf16 %v451, %v450
        %v458 = vpack.c.bf16 %v453, %v452
        %v459 = vpack.c.bf16 %v455, %v454
        %v460 = vunpack.c.l.bf16 %v416
        %v461 = vunpack.c.h.bf16 %v416
        %v462 = vunpack.c.l.bf16 %v417
        %v463 = vunpack.c.h.bf16 %v417
        %v464 = vunpack.c.l.bf16 %v418
        %v465 = vunpack.c.h.bf16 %v418
        %v466 = vunpack.c.l.bf16 %v419
        %v467 = vunpack.c.h.bf16 %v419
        %v468 = vunpack.c.l.bf16 %v456
        %v469 = vunpack.c.h.bf16 %v456
        %v470 = vunpack.c.l.bf16 %v457
        %v471 = vunpack.c.h.bf16 %v457
        %v472 = vunpack.c.l.bf16 %v458
        %v473 = vunpack.c.h.bf16 %v458
        %v474 = vunpack.c.l.bf16 %v459
        %v475 = vunpack.c.h.bf16 %v459
        %v476 = vadd.f32 %v460, %v468
        %v477 = vadd.f32 %v461, %v469
        %v478 = vadd.f32 %v462, %v470
        %v479 = vadd.f32 %v463, %v471
        %v480 = vadd.f32 %v464, %v472
        %v481 = vadd.f32 %v465, %v473
        %v482 = vadd.f32 %v466, %v474
        %v483 = vadd.f32 %v467, %v475
        %v484 = vpack.c.bf16 %v477, %v476
        %v485 = vpack.c.bf16 %v479, %v478
        %v486 = vpack.c.bf16 %v481, %v480
        %v487 = vpack.c.bf16 %v483, %v482
        %488 = vset.pattern.permute.xlu0 3
        %489 = vperm.xlu0 %488, %v285
        %v490 = vpop.permute.xlu0 %489
        %491 = vset.pattern.permute.xlu0 3
        %492 = vperm.xlu0 %491, %v286
        %v493 = vpop.permute.xlu0 %492
        %494 = vset.pattern.permute.xlu0 3
        %495 = vperm.xlu0 %494, %v287
        %v496 = vpop.permute.xlu0 %495
        %497 = vset.pattern.permute.xlu0 3
        %498 = vperm.xlu0 %497, %v288
        %v499 = vpop.permute.xlu0 %498
        %vm500 = vcmp.eq.s32.totalorder %v490, %v290
        %vm501 = vcmp.eq.s32.totalorder %v490, %v291
        %vm502 = vcmp.eq.s32.totalorder %v493, %v290
        %vm503 = vcmp.eq.s32.totalorder %v493, %v291
        %vm504 = vcmp.eq.s32.totalorder %v496, %v290
        %vm505 = vcmp.eq.s32.totalorder %v496, %v291
        %vm506 = vcmp.eq.s32.totalorder %v499, %v290
        %vm507 = vcmp.eq.s32.totalorder %v499, %v291
        %v508 = vsel %vm500, 1, 0
        %v509 = vsel %vm501, 1, 0
        %v510 = vsel %vm502, 1, 0
        %v511 = vsel %vm503, 1, 0
        %v512 = vsel %vm504, 1, 0
        %v513 = vsel %vm505, 1, 0
        %v514 = vsel %vm506, 1, 0
        %v515 = vsel %vm507, 1, 0
        %v516 = vcvt.s32.f32 %v508
        %v517 = vcvt.s32.f32 %v509
        %v518 = vcvt.s32.f32 %v510
        %v519 = vcvt.s32.f32 %v511
        %v520 = vcvt.s32.f32 %v512
        %v521 = vcvt.s32.f32 %v513
        %v522 = vcvt.s32.f32 %v514
        %v523 = vcvt.s32.f32 %v515
        %v524 = vpack.c.bf16 %v517, %v516
        %v525 = vpack.c.bf16 %v519, %v518
        %v526 = vpack.c.bf16 %v521, %v520
        %v527 = vpack.c.bf16 %v523, %v522
        %v528 = vunpack.c.l.bf16 %v484
        %v529 = vunpack.c.h.bf16 %v484
        %v530 = vunpack.c.l.bf16 %v485
        %v531 = vunpack.c.h.bf16 %v485
        %v532 = vunpack.c.l.bf16 %v486
        %v533 = vunpack.c.h.bf16 %v486
        %v534 = vunpack.c.l.bf16 %v487
        %v535 = vunpack.c.h.bf16 %v487
        %v536 = vunpack.c.l.bf16 %v524
        %v537 = vunpack.c.h.bf16 %v524
        %v538 = vunpack.c.l.bf16 %v525
        %v539 = vunpack.c.h.bf16 %v525
        %v540 = vunpack.c.l.bf16 %v526
        %v541 = vunpack.c.h.bf16 %v526
        %v542 = vunpack.c.l.bf16 %v527
        %v543 = vunpack.c.h.bf16 %v527
        %v544 = vadd.f32 %v528, %v536
        %v545 = vadd.f32 %v529, %v537
        %v546 = vadd.f32 %v530, %v538
        %v547 = vadd.f32 %v531, %v539
        %v548 = vadd.f32 %v532, %v540
        %v549 = vadd.f32 %v533, %v541
        %v550 = vadd.f32 %v534, %v542
        %v551 = vadd.f32 %v535, %v543
        %v552 = vpack.c.bf16 %v545, %v544
        %v553 = vpack.c.bf16 %v547, %v546
        %v554 = vpack.c.bf16 %v549, %v548
        %v555 = vpack.c.bf16 %v551, %v550
        %556 = vset.pattern.permute.xlu0 4
        %557 = vperm.xlu0 %556, %v285
        %v558 = vpop.permute.xlu0 %557
        %559 = vset.pattern.permute.xlu0 4
        %560 = vperm.xlu0 %559, %v286
        %v561 = vpop.permute.xlu0 %560
        %562 = vset.pattern.permute.xlu0 4
        %563 = vperm.xlu0 %562, %v287
        %v564 = vpop.permute.xlu0 %563
        %565 = vset.pattern.permute.xlu0 4
        %566 = vperm.xlu0 %565, %v288
        %v567 = vpop.permute.xlu0 %566
        %vm568 = vcmp.eq.s32.totalorder %v558, %v290
        %vm569 = vcmp.eq.s32.totalorder %v558, %v291
        %vm570 = vcmp.eq.s32.totalorder %v561, %v290
        %vm571 = vcmp.eq.s32.totalorder %v561, %v291
        %vm572 = vcmp.eq.s32.totalorder %v564, %v290
        %vm573 = vcmp.eq.s32.totalorder %v564, %v291
        %vm574 = vcmp.eq.s32.totalorder %v567, %v290
        %vm575 = vcmp.eq.s32.totalorder %v567, %v291
        %v576 = vsel %vm568, 1, 0
        %v577 = vsel %vm569, 1, 0
        %v578 = vsel %vm570, 1, 0
        %v579 = vsel %vm571, 1, 0
        %v580 = vsel %vm572, 1, 0
        %v581 = vsel %vm573, 1, 0
        %v582 = vsel %vm574, 1, 0
        %v583 = vsel %vm575, 1, 0
        %v584 = vcvt.s32.f32 %v576
        %v585 = vcvt.s32.f32 %v577
        %v586 = vcvt.s32.f32 %v578
        %v587 = vcvt.s32.f32 %v579
        %v588 = vcvt.s32.f32 %v580
        %v589 = vcvt.s32.f32 %v581
        %v590 = vcvt.s32.f32 %v582
        %v591 = vcvt.s32.f32 %v583
        %v592 = vpack.c.bf16 %v585, %v584
        %v593 = vpack.c.bf16 %v587, %v586
        %v594 = vpack.c.bf16 %v589, %v588
        %v595 = vpack.c.bf16 %v591, %v590
        %v596 = vunpack.c.l.bf16 %v552
        %v597 = vunpack.c.h.bf16 %v552
        %v598 = vunpack.c.l.bf16 %v553
        %v599 = vunpack.c.h.bf16 %v553
        %v600 = vunpack.c.l.bf16 %v554
        %v601 = vunpack.c.h.bf16 %v554
        %v602 = vunpack.c.l.bf16 %v555
        %v603 = vunpack.c.h.bf16 %v555
        %v604 = vunpack.c.l.bf16 %v592
        %v605 = vunpack.c.h.bf16 %v592
        %v606 = vunpack.c.l.bf16 %v593
        %v607 = vunpack.c.h.bf16 %v593
        %v608 = vunpack.c.l.bf16 %v594
        %v609 = vunpack.c.h.bf16 %v594
        %v610 = vunpack.c.l.bf16 %v595
        %v611 = vunpack.c.h.bf16 %v595
        %v612 = vadd.f32 %v596, %v604
        %v613 = vadd.f32 %v597, %v605
        %v614 = vadd.f32 %v598, %v606
        %v615 = vadd.f32 %v599, %v607
        %v616 = vadd.f32 %v600, %v608
        %v617 = vadd.f32 %v601, %v609
        %v618 = vadd.f32 %v602, %v610
        %v619 = vadd.f32 %v603, %v611
        %v620 = vpack.c.bf16 %v613, %v612
        %v621 = vpack.c.bf16 %v615, %v614
        %v622 = vpack.c.bf16 %v617, %v616
        %v623 = vpack.c.bf16 %v619, %v618
        %624 = vset.pattern.permute.xlu0 5
        %625 = vperm.xlu0 %624, %v285
        %v626 = vpop.permute.xlu0 %625
        %627 = vset.pattern.permute.xlu0 5
        %628 = vperm.xlu0 %627, %v286
        %v629 = vpop.permute.xlu0 %628
        %630 = vset.pattern.permute.xlu0 5
        %631 = vperm.xlu0 %630, %v287
        %v632 = vpop.permute.xlu0 %631
        %633 = vset.pattern.permute.xlu0 5
        %634 = vperm.xlu0 %633, %v288
        %v635 = vpop.permute.xlu0 %634
        %vm636 = vcmp.eq.s32.totalorder %v626, %v290
        %vm637 = vcmp.eq.s32.totalorder %v626, %v291
        %vm638 = vcmp.eq.s32.totalorder %v629, %v290
        %vm639 = vcmp.eq.s32.totalorder %v629, %v291
        %vm640 = vcmp.eq.s32.totalorder %v632, %v290
        %vm641 = vcmp.eq.s32.totalorder %v632, %v291
        %vm642 = vcmp.eq.s32.totalorder %v635, %v290
        %vm643 = vcmp.eq.s32.totalorder %v635, %v291
        %v644 = vsel %vm636, 1, 0
        %v645 = vsel %vm637, 1, 0
        %v646 = vsel %vm638, 1, 0
        %v647 = vsel %vm639, 1, 0
        %v648 = vsel %vm640, 1, 0
        %v649 = vsel %vm641, 1, 0
        %v650 = vsel %vm642, 1, 0
        %v651 = vsel %vm643, 1, 0
        %v652 = vcvt.s32.f32 %v644
        %v653 = vcvt.s32.f32 %v645
        %v654 = vcvt.s32.f32 %v646
        %v655 = vcvt.s32.f32 %v647
        %v656 = vcvt.s32.f32 %v648
        %v657 = vcvt.s32.f32 %v649
        %v658 = vcvt.s32.f32 %v650
        %v659 = vcvt.s32.f32 %v651
        %v660 = vpack.c.bf16 %v653, %v652
        %v661 = vpack.c.bf16 %v655, %v654
        %v662 = vpack.c.bf16 %v657, %v656
        %v663 = vpack.c.bf16 %v659, %v658
        %v664 = vunpack.c.l.bf16 %v620
        %v665 = vunpack.c.h.bf16 %v620
        %v666 = vunpack.c.l.bf16 %v621
        %v667 = vunpack.c.h.bf16 %v621
        %v668 = vunpack.c.l.bf16 %v622
        %v669 = vunpack.c.h.bf16 %v622
        %v670 = vunpack.c.l.bf16 %v623
        %v671 = vunpack.c.h.bf16 %v623
        %v672 = vunpack.c.l.bf16 %v660
        %v673 = vunpack.c.h.bf16 %v660
        %v674 = vunpack.c.l.bf16 %v661
        %v675 = vunpack.c.h.bf16 %v661
        %v676 = vunpack.c.l.bf16 %v662
        %v677 = vunpack.c.h.bf16 %v662
        %v678 = vunpack.c.l.bf16 %v663
        %v679 = vunpack.c.h.bf16 %v663
        %v680 = vadd.f32 %v664, %v672
        %v681 = vadd.f32 %v665, %v673
        %v682 = vadd.f32 %v666, %v674
        %v683 = vadd.f32 %v667, %v675
        %v684 = vadd.f32 %v668, %v676
        %v685 = vadd.f32 %v669, %v677
        %v686 = vadd.f32 %v670, %v678
        %v687 = vadd.f32 %v671, %v679
        %v688 = vpack.c.bf16 %v681, %v680
        %v689 = vpack.c.bf16 %v683, %v682
        %v690 = vpack.c.bf16 %v685, %v684
        %v691 = vpack.c.bf16 %v687, %v686
        %692 = vset.pattern.permute.xlu0 6
        %693 = vperm.xlu0 %692, %v285
        %v694 = vpop.permute.xlu0 %693
        %695 = vset.pattern.permute.xlu0 6
        %696 = vperm.xlu0 %695, %v286
        %v697 = vpop.permute.xlu0 %696
        %698 = vset.pattern.permute.xlu0 6
        %699 = vperm.xlu0 %698, %v287
        %v700 = vpop.permute.xlu0 %699
        %701 = vset.pattern.permute.xlu0 6
        %702 = vperm.xlu0 %701, %v288
        %v703 = vpop.permute.xlu0 %702
        %vm704 = vcmp.eq.s32.totalorder %v694, %v290
        %vm705 = vcmp.eq.s32.totalorder %v694, %v291
        %vm706 = vcmp.eq.s32.totalorder %v697, %v290
        %vm707 = vcmp.eq.s32.totalorder %v697, %v291
        %vm708 = vcmp.eq.s32.totalorder %v700, %v290
        %vm709 = vcmp.eq.s32.totalorder %v700, %v291
        %vm710 = vcmp.eq.s32.totalorder %v703, %v290
        %vm711 = vcmp.eq.s32.totalorder %v703, %v291
        %v712 = vsel %vm704, 1, 0
        %v713 = vsel %vm705, 1, 0
        %v714 = vsel %vm706, 1, 0
        %v715 = vsel %vm707, 1, 0
        %v716 = vsel %vm708, 1, 0
        %v717 = vsel %vm709, 1, 0
        %v718 = vsel %vm710, 1, 0
        %v719 = vsel %vm711, 1, 0
        %v720 = vcvt.s32.f32 %v712
        %v721 = vcvt.s32.f32 %v713
        %v722 = vcvt.s32.f32 %v714
        %v723 = vcvt.s32.f32 %v715
        %v724 = vcvt.s32.f32 %v716
        %v725 = vcvt.s32.f32 %v717
        %v726 = vcvt.s32.f32 %v718
        %v727 = vcvt.s32.f32 %v719
        %v728 = vpack.c.bf16 %v721, %v720
        %v729 = vpack.c.bf16 %v723, %v722
        %v730 = vpack.c.bf16 %v725, %v724
        %v731 = vpack.c.bf16 %v727, %v726
        %v732 = vunpack.c.l.bf16 %v688
        %v733 = vunpack.c.h.bf16 %v688
        %v734 = vunpack.c.l.bf16 %v689
        %v735 = vunpack.c.h.bf16 %v689
        %v736 = vunpack.c.l.bf16 %v690
        %v737 = vunpack.c.h.bf16 %v690
        %v738 = vunpack.c.l.bf16 %v691
        %v739 = vunpack.c.h.bf16 %v691
        %v740 = vunpack.c.l.bf16 %v728
        %v741 = vunpack.c.h.bf16 %v728
        %v742 = vunpack.c.l.bf16 %v729
        %v743 = vunpack.c.h.bf16 %v729
        %v744 = vunpack.c.l.bf16 %v730
        %v745 = vunpack.c.h.bf16 %v730
        %v746 = vunpack.c.l.bf16 %v731
        %v747 = vunpack.c.h.bf16 %v731
        %v748 = vadd.f32 %v732, %v740
        %v749 = vadd.f32 %v733, %v741
        %v750 = vadd.f32 %v734, %v742
        %v751 = vadd.f32 %v735, %v743
        %v752 = vadd.f32 %v736, %v744
        %v753 = vadd.f32 %v737, %v745
        %v754 = vadd.f32 %v738, %v746
        %v755 = vadd.f32 %v739, %v747
        %v756 = vpack.c.bf16 %v749, %v748
        %v757 = vpack.c.bf16 %v751, %v750
        %v758 = vpack.c.bf16 %v753, %v752
        %v759 = vpack.c.bf16 %v755, %v754
        %760 = vset.pattern.permute.xlu0 7
        %761 = vperm.xlu0 %760, %v285
        %v762 = vpop.permute.xlu0 %761
        %763 = vset.pattern.permute.xlu0 7
        %764 = vperm.xlu0 %763, %v286
        %v765 = vpop.permute.xlu0 %764
        %766 = vset.pattern.permute.xlu0 7
        %767 = vperm.xlu0 %766, %v287
        %v768 = vpop.permute.xlu0 %767
        %769 = vset.pattern.permute.xlu0 7
        %770 = vperm.xlu0 %769, %v288
        %v771 = vpop.permute.xlu0 %770
        %vm772 = vcmp.eq.s32.totalorder %v762, %v290
        %vm773 = vcmp.eq.s32.totalorder %v762, %v291
        %vm774 = vcmp.eq.s32.totalorder %v765, %v290
        %vm775 = vcmp.eq.s32.totalorder %v765, %v291
        %vm776 = vcmp.eq.s32.totalorder %v768, %v290
        %vm777 = vcmp.eq.s32.totalorder %v768, %v291
        %vm778 = vcmp.eq.s32.totalorder %v771, %v290
        %vm779 = vcmp.eq.s32.totalorder %v771, %v291
        %v780 = vsel %vm772, 1, 0
        %v781 = vsel %vm773, 1, 0
        %v782 = vsel %vm774, 1, 0
        %v783 = vsel %vm775, 1, 0
        %v784 = vsel %vm776, 1, 0
        %v785 = vsel %vm777, 1, 0
        %v786 = vsel %vm778, 1, 0
        %v787 = vsel %vm779, 1, 0
        %v788 = vcvt.s32.f32 %v780
        %v789 = vcvt.s32.f32 %v781
        %v790 = vcvt.s32.f32 %v782
        %v791 = vcvt.s32.f32 %v783
        %v792 = vcvt.s32.f32 %v784
        %v793 = vcvt.s32.f32 %v785
        %v794 = vcvt.s32.f32 %v786
        %v795 = vcvt.s32.f32 %v787
        %v796 = vpack.c.bf16 %v789, %v788
        %v797 = vpack.c.bf16 %v791, %v790
        %v798 = vpack.c.bf16 %v793, %v792
        %v799 = vpack.c.bf16 %v795, %v794
        %v800 = vunpack.c.l.bf16 %v756
        %v801 = vunpack.c.h.bf16 %v756
        %v802 = vunpack.c.l.bf16 %v757
        %v803 = vunpack.c.h.bf16 %v757
        %v804 = vunpack.c.l.bf16 %v758
        %v805 = vunpack.c.h.bf16 %v758
        %v806 = vunpack.c.l.bf16 %v759
        %v807 = vunpack.c.h.bf16 %v759
        %v808 = vunpack.c.l.bf16 %v796
        %v809 = vunpack.c.h.bf16 %v796
        %v810 = vunpack.c.l.bf16 %v797
        %v811 = vunpack.c.h.bf16 %v797
        %v812 = vunpack.c.l.bf16 %v798
        %v813 = vunpack.c.h.bf16 %v798
        %v814 = vunpack.c.l.bf16 %v799
        %v815 = vunpack.c.h.bf16 %v799
        %v816 = vadd.f32 %v800, %v808
        %v817 = vadd.f32 %v801, %v809
        %v818 = vadd.f32 %v802, %v810
        %v819 = vadd.f32 %v803, %v811
        %v820 = vadd.f32 %v804, %v812
        %v821 = vadd.f32 %v805, %v813
        %v822 = vadd.f32 %v806, %v814
        %v823 = vadd.f32 %v807, %v815
        %v824 = vpack.c.bf16 %v818, %v816
        %v825 = vpack.c.bf16 %v819, %v817
        %v826 = vpack.c.bf16 %v822, %v820
        %v827 = vpack.c.bf16 %v823, %v821
        %v828 = vld [vmem:[%s276] sm:$0xff]
        %v829 = vld [vmem:[%s276 + $0x8] sm:$0xff]
        %v830 = vld [vmem:[%s276 + $0x10] sm:$0xff]
        %v831 = vld [vmem:[%s276 + $0x18] sm:$0xff]
        %v832 = vld [vmem:[#allocation5] sm:$0xf]
        %v833 = vld [vmem:[#allocation5 + $0x4] sm:$0xf]
        %v834 = vld [vmem:[#allocation5 + $0x8] sm:$0xf]
        %v835 = vld [vmem:[#allocation5 + $0xc] sm:$0xf]
        %v836 = vld [vmem:[#allocation5 + $0x10] sm:$0xf]
        %v837 = vld [vmem:[#allocation5 + $0x14] sm:$0xf]
        %v838 = vld [vmem:[#allocation5 + $0x18] sm:$0xf]
        %v839 = vld [vmem:[#allocation5 + $0x1c] sm:$0xf]
        %v840 = vld [vmem:[#allocation5 + $0x20] sm:$0xf]
        %v841 = vld [vmem:[#allocation5 + $0x24] sm:$0xf]
        %v842 = vld [vmem:[#allocation5 + $0x28] sm:$0xf]
        %v843 = vld [vmem:[#allocation5 + $0x2c] sm:$0xf]
        %v844 = vld [vmem:[#allocation5 + $0x30] sm:$0xf]
        %v845 = vld [vmem:[#allocation5 + $0x34] sm:$0xf]
        %v846 = vld [vmem:[#allocation5 + $0x38] sm:$0xf]
        %v847 = vld [vmem:[#allocation5 + $0x3c] sm:$0xf]
        %v848 = vld [vmem:[#allocation5 + $0x40] sm:$0xf]
        %v849 = vld [vmem:[#allocation5 + $0x44] sm:$0xf]
        %v850 = vld [vmem:[#allocation5 + $0x48] sm:$0xf]
        %v851 = vld [vmem:[#allocation5 + $0x4c] sm:$0xf]
        %v852 = vld [vmem:[#allocation5 + $0x50] sm:$0xf]
        %v853 = vld [vmem:[#allocation5 + $0x54] sm:$0xf]
        %v854 = vld [vmem:[#allocation5 + $0x58] sm:$0xf]
        %v855 = vld [vmem:[#allocation5 + $0x5c] sm:$0xf]
        %v856 = vld [vmem:[#allocation5 + $0x60] sm:$0xf]
        %v857 = vld [vmem:[#allocation5 + $0x64] sm:$0xf]
        %v858 = vld [vmem:[#allocation5 + $0x68] sm:$0xf]
        %v859 = vld [vmem:[#allocation5 + $0x6c] sm:$0xf]
        %v860 = vld [vmem:[#allocation5 + $0x70] sm:$0xf]
        %v861 = vld [vmem:[#allocation5 + $0x74] sm:$0xf]
        %v862 = vld [vmem:[#allocation5 + $0x78] sm:$0xf]
        %v863 = vld [vmem:[#allocation5 + $0x7c] sm:$0xf]
        %v864 = vld [vmem:[#allocation2] sm:$0xf]
        %v865 = vld [vmem:[#allocation2 + $0x4] sm:$0xf]
        %v866 = vld [vmem:[#allocation2 + $0x8] sm:$0xf]
        %v867 = vld [vmem:[#allocation2 + $0xc] sm:$0xf]
        %v868 = vld [vmem:[#allocation2 + $0x10] sm:$0xf]
        %v869 = vld [vmem:[#allocation2 + $0x14] sm:$0xf]
        %v870 = vld [vmem:[#allocation2 + $0x18] sm:$0xf]
        %v871 = vld [vmem:[#allocation2 + $0x1c] sm:$0xf]
        %v872 = vld [vmem:[#allocation2 + $0x20] sm:$0xf]
        %v873 = vld [vmem:[#allocation2 + $0x24] sm:$0xf]
        %v874 = vld [vmem:[#allocation2 + $0x28] sm:$0xf]
        %v875 = vld [vmem:[#allocation2 + $0x2c] sm:$0xf]
        %v876 = vld [vmem:[#allocation2 + $0x30] sm:$0xf]
        %v877 = vld [vmem:[#allocation2 + $0x34] sm:$0xf]
        %v878 = vld [vmem:[#allocation2 + $0x38] sm:$0xf]
        %v879 = vld [vmem:[#allocation2 + $0x3c] sm:$0xf]
        %v880 = vld [vmem:[#allocation2 + $0x40] sm:$0xf]
        %v881 = vld [vmem:[#allocation2 + $0x44] sm:$0xf]
        %v882 = vld [vmem:[#allocation2 + $0x48] sm:$0xf]
        %v883 = vld [vmem:[#allocation2 + $0x4c] sm:$0xf]
        %v884 = vld [vmem:[#allocation2 + $0x50] sm:$0xf]
        %v885 = vld [vmem:[#allocation2 + $0x54] sm:$0xf]
        %v886 = vld [vmem:[#allocation2 + $0x58] sm:$0xf]
        %v887 = vld [vmem:[#allocation2 + $0x5c] sm:$0xf]
        %v888 = vld [vmem:[#allocation2 + $0x60] sm:$0xf]
        %v889 = vld [vmem:[#allocation2 + $0x64] sm:$0xf]
        %v890 = vld [vmem:[#allocation2 + $0x68] sm:$0xf]
        %v891 = vld [vmem:[#allocation2 + $0x6c] sm:$0xf]
        %v892 = vld [vmem:[#allocation2 + $0x70] sm:$0xf]
        %v893 = vld [vmem:[#allocation2 + $0x74] sm:$0xf]
        %v894 = vld [vmem:[#allocation2 + $0x78] sm:$0xf]
        %v895 = vld [vmem:[#allocation2 + $0x7c] sm:$0xf]
        %v928 = vunpack.c.l.b16 %v864
        %v929 = vunpack.c.l.b16 %v865
        %v930 = vunpack.c.l.b16 %v866
        %v931 = vunpack.c.l.b16 %v867
        %v932 = vunpack.c.l.b16 %v868
        %v933 = vunpack.c.l.b16 %v869
        %v934 = vunpack.c.l.b16 %v870
        %v935 = vunpack.c.l.b16 %v871
        %v936 = vunpack.c.l.b16 %v872
        %v937 = vunpack.c.l.b16 %v873
        %v938 = vunpack.c.l.b16 %v874
        %v939 = vunpack.c.l.b16 %v875
        %v940 = vunpack.c.l.b16 %v876
        %v941 = vunpack.c.l.b16 %v877
        %v942 = vunpack.c.l.b16 %v878
        %v943 = vunpack.c.l.b16 %v879
        %v944 = vunpack.c.l.b16 %v880
        %v945 = vunpack.c.l.b16 %v881
        %v946 = vunpack.c.l.b16 %v882
        %v947 = vunpack.c.l.b16 %v883
        %v948 = vunpack.c.l.b16 %v884
        %v949 = vunpack.c.l.b16 %v885
        %v950 = vunpack.c.l.b16 %v886
        %v951 = vunpack.c.l.b16 %v887
        %v952 = vunpack.c.l.b16 %v888
        %v953 = vunpack.c.l.b16 %v889
        %v954 = vunpack.c.l.b16 %v890
        %v955 = vunpack.c.l.b16 %v891
        %v956 = vunpack.c.l.b16 %v892
        %v957 = vunpack.c.l.b16 %v893
        %v958 = vunpack.c.l.b16 %v894
        %v959 = vunpack.c.l.b16 %v895
        %v960 = vpack.c.b16 %v929, %v928
        %v961 = vpack.c.b16 %v931, %v930
        %v962 = vpack.c.b16 %v933, %v932
        %v963 = vpack.c.b16 %v935, %v934
        %v964 = vpack.c.b16 %v937, %v936
        %v965 = vpack.c.b16 %v939, %v938
        %v966 = vpack.c.b16 %v941, %v940
        %v967 = vpack.c.b16 %v943, %v942
        %v968 = vpack.c.b16 %v945, %v944
        %v969 = vpack.c.b16 %v947, %v946
        %v970 = vpack.c.b16 %v949, %v948
        %v971 = vpack.c.b16 %v951, %v950
        %v972 = vpack.c.b16 %v953, %v952
        %v973 = vpack.c.b16 %v955, %v954
        %v974 = vpack.c.b16 %v957, %v956
        %v975 = vpack.c.b16 %v959, %v958
        %992 = vmatpush.bf16.msra.mxu0 %v967
        %993 = vmatpush.bf16.msra.mxu0 %v966
        %994 = vmatpush.bf16.msra.mxu0 %v965
        %995 = vmatpush.bf16.msra.mxu0 %v964
        %996 = vmatpush.bf16.msra.mxu0 %v963
        %997 = vmatpush.bf16.msra.mxu0 %v962
        %998 = vmatpush.bf16.msra.mxu0 %v961
        %999 = vmatpush.bf16.msra.mxu0 %v960
        %1000 = vmatmul.bf16.gmra.mxu0 %v824
        %v1001 = vpop.f32.mrf.mxu0
        %v1002 = vadd.f32 0.0, %v1001
        %v1003 = vpop.f32.mrf.mxu0
        %v1004 = vadd.f32 0.0, %v1003
        %1005 = vmatmul.bf16.gmra.mxu0 %v826
        %v1006 = vpop.f32.mrf.mxu0
        %v1007 = vadd.f32 0.0, %v1006
        %v1008 = vpop.f32.mrf.mxu0
        %v1009 = vadd.f32 0.0, %v1008
        %1010 = vdwg.mxu0
        %1011 = vmatpush.bf16.msra.mxu0 %v975
        %1012 = vmatpush.bf16.msra.mxu0 %v974
        %1013 = vmatpush.bf16.msra.mxu0 %v973
        %1014 = vmatpush.bf16.msra.mxu0 %v972
        %1015 = vmatpush.bf16.msra.mxu0 %v971
        %1016 = vmatpush.bf16.msra.mxu0 %v970
        %1017 = vmatpush.bf16.msra.mxu0 %v969
        %1018 = vmatpush.bf16.msra.mxu0 %v968
        %1019 = vmatmul.bf16.gmra.mxu0 %v825
        %v1020 = vpop.f32.mrf.mxu0
        %v1021 = vadd.f32 %v1002, %v1020
        %v1022 = vpop.f32.mrf.mxu0
        %v1023 = vadd.f32 %v1004, %v1022
        %1024 = vmatmul.bf16.gmra.mxu0 %v827
        %v1025 = vpop.f32.mrf.mxu0
        %v1026 = vadd.f32 %v1007, %v1025
        %v1027 = vpop.f32.mrf.mxu0
        %v1028 = vadd.f32 %v1009, %v1027
        %1029 = vdwg.mxu0
        %v1034 = vunpack.c.l.b16 %v828
        %v1035 = vunpack.c.h.b16 %v828
        %v1036 = vunpack.c.l.b16 %v829
        %v1037 = vunpack.c.h.b16 %v829
        %v1038 = vunpack.c.l.b16 %v830
        %v1039 = vunpack.c.h.b16 %v830
        %v1040 = vunpack.c.l.b16 %v831
        %v1041 = vunpack.c.h.b16 %v831
        %v1042 = vpack.c.b16 %v1036, %v1034
        %v1043 = vpack.c.b16 %v1037, %v1035
        %v1044 = vpack.c.b16 %v1040, %v1038
        %v1045 = vpack.c.b16 %v1041, %v1039
        %v1082 = vunpack.c.l.b16 %v832
        %v1083 = vunpack.c.l.b16 %v833
        %v1084 = vunpack.c.l.b16 %v834
        %v1085 = vunpack.c.l.b16 %v835
        %v1086 = vunpack.c.l.b16 %v836
        %v1087 = vunpack.c.l.b16 %v837
        %v1088 = vunpack.c.l.b16 %v838
        %v1089 = vunpack.c.l.b16 %v839
        %v1090 = vunpack.c.l.b16 %v840
        %v1091 = vunpack.c.l.b16 %v841
        %v1092 = vunpack.c.l.b16 %v842
        %v1093 = vunpack.c.l.b16 %v843
        %v1094 = vunpack.c.l.b16 %v844
        %v1095 = vunpack.c.l.b16 %v845
        %v1096 = vunpack.c.l.b16 %v846
        %v1097 = vunpack.c.l.b16 %v847
        %v1098 = vunpack.c.l.b16 %v848
        %v1099 = vunpack.c.l.b16 %v849
        %v1100 = vunpack.c.l.b16 %v850
        %v1101 = vunpack.c.l.b16 %v851
        %v1102 = vunpack.c.l.b16 %v852
        %v1103 = vunpack.c.l.b16 %v853
        %v1104 = vunpack.c.l.b16 %v854
        %v1105 = vunpack.c.l.b16 %v855
        %v1106 = vunpack.c.l.b16 %v856
        %v1107 = vunpack.c.l.b16 %v857
        %v1108 = vunpack.c.l.b16 %v858
        %v1109 = vunpack.c.l.b16 %v859
        %v1110 = vunpack.c.l.b16 %v860
        %v1111 = vunpack.c.l.b16 %v861
        %v1112 = vunpack.c.l.b16 %v862
        %v1113 = vunpack.c.l.b16 %v863
        %v1114 = vpack.c.b16 %v1083, %v1082
        %v1115 = vpack.c.b16 %v1085, %v1084
        %v1116 = vpack.c.b16 %v1087, %v1086
        %v1117 = vpack.c.b16 %v1089, %v1088
        %v1118 = vpack.c.b16 %v1091, %v1090
        %v1119 = vpack.c.b16 %v1093, %v1092
        %v1120 = vpack.c.b16 %v1095, %v1094
        %v1121 = vpack.c.b16 %v1097, %v1096
        %v1122 = vpack.c.b16 %v1099, %v1098
        %v1123 = vpack.c.b16 %v1101, %v1100
        %v1124 = vpack.c.b16 %v1103, %v1102
        %v1125 = vpack.c.b16 %v1105, %v1104
        %v1126 = vpack.c.b16 %v1107, %v1106
        %v1127 = vpack.c.b16 %v1109, %v1108
        %v1128 = vpack.c.b16 %v1111, %v1110
        %v1129 = vpack.c.b16 %v1113, %v1112
        %1146 = vmatpush.bf16.msra.mxu0 %v1121
        %1147 = vmatpush.bf16.msra.mxu0 %v1120
        %1148 = vmatpush.bf16.msra.mxu0 %v1119
        %1149 = vmatpush.bf16.msra.mxu0 %v1118
        %1150 = vmatpush.bf16.msra.mxu0 %v1117
        %1151 = vmatpush.bf16.msra.mxu0 %v1116
        %1152 = vmatpush.bf16.msra.mxu0 %v1115
        %1153 = vmatpush.bf16.msra.mxu0 %v1114
        %1154 = vmatmul.bf16.gmra.mxu0 %v1042
        %v1155 = vpop.f32.mrf.mxu0
        %v1156 = vadd.f32 %v1021, %v1155
        %v1157 = vpop.f32.mrf.mxu0
        %v1158 = vadd.f32 %v1023, %v1157
        %1159 = vmatmul.bf16.gmra.mxu0 %v1044
        %v1160 = vpop.f32.mrf.mxu0
        %v1161 = vadd.f32 %v1026, %v1160
        %v1162 = vpop.f32.mrf.mxu0
        %v1163 = vadd.f32 %v1028, %v1162
        %1164 = vdwg.mxu0
        %1165 = vmatpush.bf16.msra.mxu0 %v1129
        %1166 = vmatpush.bf16.msra.mxu0 %v1128
        %1167 = vmatpush.bf16.msra.mxu0 %v1127
        %1168 = vmatpush.bf16.msra.mxu0 %v1126
        %1169 = vmatpush.bf16.msra.mxu0 %v1125
        %1170 = vmatpush.bf16.msra.mxu0 %v1124
        %1171 = vmatpush.bf16.msra.mxu0 %v1123
        %1172 = vmatpush.bf16.msra.mxu0 %v1122
        %1173 = vmatmul.bf16.gmra.mxu0 %v1043
        %v1174 = vpop.f32.mrf.mxu0
        %v1175 = vadd.f32 %v1156, %v1174
        %v1176 = vpop.f32.mrf.mxu0
        %v1177 = vadd.f32 %v1158, %v1176
        %1178 = vmatmul.bf16.gmra.mxu0 %v1045
        %v1179 = vpop.f32.mrf.mxu0
        %v1180 = vadd.f32 %v1161, %v1179
        %v1181 = vpop.f32.mrf.mxu0
        %v1182 = vadd.f32 %v1163, %v1181
        %1183 = vdwg.mxu0
        %v1184 = vld [vmem:[%s4] sm:$0x1]
        %v1186 = vperm.slane %v1184, 0
        %v1188 = vadd.f32 %v1175, %v1186
        %v1189 = vadd.f32 %v1177, %v1186
        %v1190 = vadd.f32 %v1180, %v1186
        %v1191 = vadd.f32 %v1182, %v1186
        %1192 = vst [vmem:[%s270] sm:$0xff] %v1188
        %1193 = vst [vmem:[%s270 + $0x8] sm:$0xff] %v1189
        %1194 = vst [vmem:[%s270 + $0x10] sm:$0xff] %v1190
        %1195 = vst [vmem:[%s270 + $0x18] sm:$0xff] %v1191
        %s1196 = sand.u32 %s144, 1
        %s1197 = scalar_lea.sflag [#allocation4], %s1196
        %s1198 = sand.u32 %s144, 1
        %s1199 = smul.addr %s1198, 32
        %s1200 = scalar_lea.vmem [#allocation7], %s1199
        // Predicated region
        $region49: #{tpu_custom_call.1} parent=39 // pred_check
          %p1201 = pneg %p154
        $region50: #{tpu_custom_call.1} parent=39 // pred_check_branch
          %1203 = sbr.rel (%p1201) target = $region52
        $region51: #{tpu_custom_call.1} parent=39 // pred_region
          %s1204 = smul.u32 4, %s21
          %1206 = vsyncadd %s1197, 0
          %s1207 = smul.addr %s1204, 8
          %s1208 = scalar_lea.hbm %s5, %s1207
          %s1209 = sshll.u32 %s1200, 4
          %s1210 = int_to_ptr.vmem [resolvable:$true] %s1209
          %s1211 = sshll.u32 %s1208, 4
          %s1212 = int_to_ptr.hbm [resolvable:$true] %s1211
          %1217 = dma.vmem_to_hbm [thread:$0]  %s1210, 512, %s1212, %s1197, 128, 128, 8
        $region52: #{tpu_custom_call.1} parent=39 // pred_fallthru
          _
      $region40: #{tpu_custom_call.1} parent=5 // pred_fallthru
        _
      %p1218 = scmp.le.s32.totalorder 2, %s16
      // Predicated region
      $region53: #{tpu_custom_call.1} parent=5 // pred_check
        %p1219 = pneg %p1218
      $region54: #{tpu_custom_call.1} parent=5 // pred_check_branch
        %1221 = sbr.rel (%p1219) target = $region56
      $region55: #{tpu_custom_call.1} parent=5 // pred_region
        %s1222 = ssub.s32 %s16, 2
        // Predicated region
        $region57: #{tpu_custom_call.1} parent=55 // pred_check
          %p1223 = pneg %p160
        $region58: #{tpu_custom_call.1} parent=55 // pred_check_branch
          %1225 = sbr.rel (%p1223) target = $region60
        $region59: #{tpu_custom_call.1} parent=55 // pred_region
          %s1226 = sand.u32 %s145, 1
          %s1227 = scalar_lea.sflag [#allocation4], %s1226
          %s1228 = sand.u32 %s145, 1
          %s1229 = smul.addr %s1228, 32
          %s1230 = scalar_lea.vmem [#allocation7], %s1229
          %1232 = dma.done %s1227, 512
        $region60: #{tpu_custom_call.1} parent=55 // pred_fallthru
          _
      $region56: #{tpu_custom_call.1} parent=5 // pred_fallthru
        _
    $region6: #{tpu_custom_call.1} parent=1 // loop_footer
      %s20 = sadd.s32 1, %s16
    $region7: #{tpu_custom_call.1} parent=1 // loop_footer_branch
      %15 = sbr.rel target = $region3
    $region8: #{tpu_custom_call.1} parent=1 // loop_exit
      _
    %1233 = vsyncpa [#allocation3], 1
    %s1234 = scalar_lea.sflag [#allocation3], 1
    %1235 = vsyncpa %s1234, 1
    %1236 = vsyncpa [#allocation6], 1
    %1237 = vsyncpa [#allocation4], 1
    %s1238 = scalar_lea.sflag [#allocation4], 1
    %1239 = vsyncpa %s1238, 1

</llo_original>
